<compile_context>
chip_gen: v5e
topology: v5e:2x2
jax: 0.10.0
libtpu: 0.0.40
codegen_flags: <defaults>
</compile_context>

<pallas_src>
import jax
import jax.numpy as jnp
import numpy as np
from jax.experimental import pallas as pl
from jax.experimental.pallas import tpu as pltpu

N_BLADES = 8  # 2**3 blades for CliffordAlgebra((1, 1, 1))


def cvp_kernel(s_ref, v_ref,
               w_lrh_ref, b_lrh_ref, m_vn_ref,
               ws_s_ref, ws_v_ref, bs_ref,
               w_v_ref, b_v_ref,
               s_out_ref, v_out_ref):
    s = s_ref[...]                       # (tb, si)
    v = v_ref[...]                       # (tb, vi*8)  channel-major, blade-minor

    # Fused left/right/hidden MVLinear: one MXU push (tb, vi*8) @ (vi*8, 3*h*8).
    # kron(W^T, I8) weights mix channels while keeping blades fixed, so no
    # blade-axis transposes / reshapes are needed inside the kernel.
    y = jnp.dot(v, w_lrh_ref[...], preferred_element_type=jnp.float32) + b_lrh_ref[...]
    h8 = y.shape[-1] // 3
    vl = y[:, :h8]                       # (tb, h*8)
    vr = y[:, h8:2 * h8]                 # (tb, h*8)
    vh = y[:, 2 * h8:]                   # (tb, h*8)

    # algebra.b (Euclidean blade sum) folded with linear_out into m_vn.
    vn = jnp.dot(vl * vr, m_vn_ref[...], preferred_element_type=jnp.float32)   # (tb, h)

    # ws(cat([s, vn])) with the concatenate eliminated (ws split ws_s | ws_v),
    # followed by scalar_act = relu.
    s_new = (jnp.dot(s, ws_s_ref[...], preferred_element_type=jnp.float32)
             + jnp.dot(vn, ws_v_ref[...], preferred_element_type=jnp.float32)
             + bs_ref[...])
    s_out_ref[...] = jnp.maximum(s_new, 0.0).astype(s_out_ref.dtype)

    # Vector path: wv(wh(v)); vector_gate=False and vector_act truthy -> identity.
    # Output is channel-major/blade-minor flattened == PyTorch (B, vo, 8) layout
    # flattened -> lane-dense store, no wrapper transpose needed.
    vout = jnp.dot(vh, w_v_ref[...], preferred_element_type=jnp.float32) + b_v_ref[...]
    v_out_ref[...] = vout.astype(v_out_ref.dtype)


def prepare_cvp_params(p):
    """One-time parameter preprocessing (hoisted out of the per-call path)."""
    nb = N_BLADES
    h = p["wl"].shape[0]
    si = p["ws"].shape[1] - h
    eye = jnp.eye(nb, dtype=jnp.float32)

    def kron_w(w):                      # (c_out, c_in) -> (c_in*8, c_out*8)
        # Acts on the flattened (channel-major, blade-minor) layout: mixes
        # channels per blade, identical to MVLinear(subspaces=False).
        return jnp.kron(w.T.astype(jnp.float32), eye)

    def scalar_blade_bias(b):           # (c,) -> (1, c*8); bias only on blade 0
        c = b.shape[0]
        return jnp.zeros((c, nb), jnp.float32).at[:, 0].set(b).reshape(1, c * nb)

    w_lrh = jnp.concatenate([kron_w(p["wl"]), kron_w(p["wr"]), kron_w(p["wh"])], axis=1)
    b_lrh = jnp.concatenate([scalar_blade_bias(p["bl"]),
                             scalar_blade_bias(p["br"]),
                             scalar_blade_bias(p["bh"])], axis=1)
    # Euclidean blade sum folded with linear_out (no bias):
    #   vn[b, j] = sum_{n,k} (vl*vr)[b, n*8+k] * wout[j, n]
    m_vn = jnp.repeat(p["wout"].T.astype(jnp.float32), nb, axis=0)            # (h*8, h)
    return dict(
        w_lrh=w_lrh,                                                          # (vi*8, 3*h*8)
        b_lrh=b_lrh,                                                          # (1, 3*h*8)
        m_vn=m_vn,                                                            # (h*8, h)
        ws_s=p["ws"][:, :si].T.astype(jnp.float32),                           # (si, so)
        ws_v=p["ws"][:, si:].T.astype(jnp.float32),                           # (h, so)
        bs=p["bs"].astype(jnp.float32)[None, :],                              # (1, so)
        w_v=kron_w(p["wv"]),                                                  # (h*8, vo*8)
        b_v=scalar_blade_bias(p["bv"]),                                       # (1, vo*8)
    )


def _pick_tb(B, max_tile=2048):
    # Grid steps cost ~0.35 us each, so make tiles as large as possible; keep
    # 2 parallel steps when legal so v7x can shard across both TensorCores.
    # Tiles must be a multiple of 8 sublanes or equal to the full batch dim.
    half = B // 2
    if B % 2 == 0 and half % 8 == 0 and half <= max_tile:
        return half
    if B <= max_tile or B % 8 != 0:
        return B
    tb = max_tile - max_tile % 8
    while tb > 8 and B % tb != 0:
        tb -= 8
    return tb


@jax.jit
def cvp_linear_pallas(s, v, prep):
    """s: (B, si) f32, v: (B, vi, 8) f32 (PyTorch layout). prep: prepare_cvp_params()."""
    B, si = s.shape
    _, vi, nb = v.shape
    assert nb == N_BLADES
    vi8 = vi * nb
    h8x3 = prep["w_lrh"].shape[1]
    h8 = h8x3 // 3
    h = prep["m_vn"].shape[1]
    so = prep["ws_s"].shape[1]
    vo8 = prep["w_v"].shape[1]

    v_flat = v.reshape(B, vi8)          # free row-major reshape, no transpose

    tb = _pick_tb(B)
    assert B % tb == 0

    d2 = lambda i: (i, 0)
    w2 = lambda i: (0, 0)
    # TODO(synk): grid-invariant weights could be single-buffered via
    # pipeline_mode=pl.Buffered(1); negligible at these KB-scale sizes.
    in_specs = [
        pl.BlockSpec((tb, si), d2),
        pl.BlockSpec((tb, vi8), d2),
        pl.BlockSpec((vi8, h8x3), w2),
        pl.BlockSpec((1, h8x3), w2),
        pl.BlockSpec((h8, h), w2),
        pl.BlockSpec((si, so), w2),
        pl.BlockSpec((h, so), w2),
        pl.BlockSpec((1, so), w2),
        pl.BlockSpec((h8, vo8), w2),
        pl.BlockSpec((1, vo8), w2),
    ]
    out_specs = [
        pl.BlockSpec((tb, so), d2),
        pl.BlockSpec((tb, vo8), d2),
    ]
    out_shape = [
        jax.ShapeDtypeStruct((B, so), jnp.float32),
        jax.ShapeDtypeStruct((B, vo8), jnp.float32),
    ]

    s_out, v_out_flat = pl.pallas_call(
        cvp_kernel,
        grid=(B // tb,),
        in_specs=in_specs,
        out_specs=out_specs,
        out_shape=out_shape,
        compiler_params=pltpu.CompilerParams(dimension_semantics=("parallel",)),
    )(s, v_flat,
      prep["w_lrh"], prep["b_lrh"], prep["m_vn"],
      prep["ws_s"], prep["ws_v"], prep["bs"],
      prep["w_v"], prep["b_v"])

    return s_out, v_out_flat.reshape(B, vo8 // nb, nb)   # back to (B, vo, 8)


def cvp_linear_reference(s, v, p):
    """Pure-JAX reference mirroring the PyTorch forward."""
    def mvlin(x, w, b):                 # x: (B, c_in, 8), w: (c_out, c_in)
        y = jnp.einsum("bmi,nm->bni", x, w)
        return y.at[..., 0].add(b)      # bias only on the scalar blade

    vl = mvlin(v, p["wl"], p["bl"])
    vr = mvlin(v, p["wr"], p["br"])
    dot = jnp.sum(vl * vr, axis=-1)                         # algebra.b, Euclidean
    vn = dot @ p["wout"].T                                  # linear_out (no bias)
    s_new = jnp.concatenate([s, vn], axis=-1) @ p["ws"].T + p["bs"]
    vh = mvlin(v, p["wh"], p["bh"])
    vout = mvlin(vh, p["wv"], p["bv"])
    return jax.nn.relu(s_new), vout


if __name__ == "__main__":
    B, si, so = 16, 4, 6
    vi, vo, h = 4, 5, 8                 # h_dim passed explicitly

    key = jax.random.PRNGKey(0)
    ks = jax.random.split(key, 16)
    rn = lambda k, shape, sc=0.3: sc * jax.random.normal(k, shape, jnp.float32)

    params = dict(
        wl=rn(ks[0], (h, vi)),  bl=rn(ks[1], (h,)),
        wr=rn(ks[2], (h, vi)),  br=rn(ks[3], (h,)),
        wout=rn(ks[4], (h, h)),
        ws=rn(ks[5], (so, si + h)), bs=rn(ks[6], (so,)),
        wh=rn(ks[7], (h, vi)),  bh=rn(ks[8], (h,)),
        wv=rn(ks[9], (vo, h)),  bv=rn(ks[10], (vo,)),
    )
    s_in = rn(ks[11], (B, si), 1.0)
    v_in = rn(ks[12], (B, vi, N_BLADES), 1.0)

    prep = prepare_cvp_params(params)   # one-time weight preprocessing
    s_out, v_out = cvp_linear_pallas(s_in, v_in, prep)
    jax.block_until_ready((s_out, v_out))

    s_ref, v_ref = cvp_linear_reference(s_in, v_in, params)
    np.testing.assert_allclose(np.asarray(s_out), np.asarray(s_ref), rtol=1e-5, atol=1e-5)
    np.testing.assert_allclose(np.asarray(v_out), np.asarray(v_ref), rtol=1e-5, atol=1e-5)

    print("KERNEL_OK")
</pallas_src>

<mosaic_0001>
module attributes {stable_mosaic.version = 11 : i64} {
  func.func @cvp_kernel(%arg0: i32, %arg1: memref<8x4xf32, #tpu.memory_space<vmem>>, %arg2: memref<8x32xf32, #tpu.memory_space<vmem>>, %arg3: memref<32x192xf32, #tpu.memory_space<vmem>>, %arg4: memref<1x192xf32, #tpu.memory_space<vmem>>, %arg5: memref<64x8xf32, #tpu.memory_space<vmem>>, %arg6: memref<4x6xf32, #tpu.memory_space<vmem>>, %arg7: memref<8x6xf32, #tpu.memory_space<vmem>>, %arg8: memref<1x6xf32, #tpu.memory_space<vmem>>, %arg9: memref<64x40xf32, #tpu.memory_space<vmem>>, %arg10: memref<1x40xf32, #tpu.memory_space<vmem>>, %arg11: memref<8x6xf32, #tpu.memory_space<vmem>>, %arg12: memref<8x40xf32, #tpu.memory_space<vmem>>) attributes {dimension_semantics = [#tpu.dimension_semantics<parallel>], iteration_bounds = array<i64: 2>, scalar_prefetch = 0 : i64, scratch_operands = 0 : i64, tpu.core_type = #tpu.core_type<tc>, window_params = [{transform_indices = @transform_0, window_bounds = array<i64: 8, 4>}, {transform_indices = @transform_1, window_bounds = array<i64: 8, 32>}, {pipeline_mode = #tpu.pipeline_mode<synchronous>, transform_indices = @transform_2, window_bounds = array<i64: 32, 192>}, {pipeline_mode = #tpu.pipeline_mode<synchronous>, transform_indices = @transform_3, window_bounds = array<i64: 1, 192>}, {pipeline_mode = #tpu.pipeline_mode<synchronous>, transform_indices = @transform_4, window_bounds = array<i64: 64, 8>}, {pipeline_mode = #tpu.pipeline_mode<synchronous>, transform_indices = @transform_5, window_bounds = array<i64: 4, 6>}, {pipeline_mode = #tpu.pipeline_mode<synchronous>, transform_indices = @transform_6, window_bounds = array<i64: 8, 6>}, {pipeline_mode = #tpu.pipeline_mode<synchronous>, transform_indices = @transform_7, window_bounds = array<i64: 1, 6>}, {pipeline_mode = #tpu.pipeline_mode<synchronous>, transform_indices = @transform_8, window_bounds = array<i64: 64, 40>}, {pipeline_mode = #tpu.pipeline_mode<synchronous>, transform_indices = @transform_9, window_bounds = array<i64: 1, 40>}, {transform_indices = @transform_10, window_bounds = array<i64: 8, 6>}, {transform_indices = @transform_11, window_bounds = array<i64: 8, 40>}]} {
    %c0 = arith.constant 0 : index
    %c0_0 = arith.constant 0 : index
    %0 = vector.load %arg1[%c0, %c0_0] : memref<8x4xf32, #tpu.memory_space<vmem>>, vector<8x4xf32>
    %c0_1 = arith.constant 0 : index
    %c0_2 = arith.constant 0 : index
    %1 = vector.load %arg2[%c0_1, %c0_2] : memref<8x32xf32, #tpu.memory_space<vmem>>, vector<8x32xf32>
    %c0_3 = arith.constant 0 : index
    %c0_4 = arith.constant 0 : index
    %2 = vector.load %arg3[%c0_3, %c0_4] : memref<32x192xf32, #tpu.memory_space<vmem>>, vector<32x192xf32>
    %cst = arith.constant dense<0.000000e+00> : vector<8x192xf32>
    %3 = tpu.matmul %1, %2, %cst {dimension_numbers = #tpu.dot_dimension_numbers<[1], [0], [0], [1], [0, 0, 1, 1], [], []>} : vector<8x32xf32>, vector<32x192xf32>, vector<8x192xf32> -> vector<8x192xf32>
    %c0_5 = arith.constant 0 : index
    %c0_6 = arith.constant 0 : index
    %4 = vector.load %arg4[%c0_5, %c0_6] : memref<1x192xf32, #tpu.memory_space<vmem>>, vector<1x192xf32>
    %5 = vector.broadcast %4 : vector<1x192xf32> to vector<8x192xf32>
    %6 = arith.addf %3, %5 : vector<8x192xf32>
    %7 = vector.extract_strided_slice %6 {offsets = [0, 0], sizes = [8, 64], strides = [1, 1]} : vector<8x192xf32> to vector<8x64xf32>
    %8 = vector.extract_strided_slice %6 {offsets = [0, 64], sizes = [8, 64], strides = [1, 1]} : vector<8x192xf32> to vector<8x64xf32>
    %9 = vector.extract_strided_slice %6 {offsets = [0, 128], sizes = [8, 64], strides = [1, 1]} : vector<8x192xf32> to vector<8x64xf32>
    %10 = arith.mulf %7, %8 : vector<8x64xf32>
    %c0_7 = arith.constant 0 : index
    %c0_8 = arith.constant 0 : index
    %11 = vector.load %arg5[%c0_7, %c0_8] : memref<64x8xf32, #tpu.memory_space<vmem>>, vector<64x8xf32>
    %cst_9 = arith.constant dense<0.000000e+00> : vector<8x8xf32>
    %12 = tpu.matmul %10, %11, %cst_9 {dimension_numbers = #tpu.dot_dimension_numbers<[1], [0], [0], [1], [0, 0, 1, 1], [], []>} : vector<8x64xf32>, vector<64x8xf32>, vector<8x8xf32> -> vector<8x8xf32>
    %c0_10 = arith.constant 0 : index
    %c0_11 = arith.constant 0 : index
    %13 = vector.load %arg6[%c0_10, %c0_11] : memref<4x6xf32, #tpu.memory_space<vmem>>, vector<4x6xf32>
    %cst_12 = arith.constant dense<0.000000e+00> : vector<8x6xf32>
    %14 = tpu.matmul %0, %13, %cst_12 {dimension_numbers = #tpu.dot_dimension_numbers<[1], [0], [0], [1], [0, 0, 1, 1], [], []>} : vector<8x4xf32>, vector<4x6xf32>, vector<8x6xf32> -> vector<8x6xf32>
    %c0_13 = arith.constant 0 : index
    %c0_14 = arith.constant 0 : index
    %15 = vector.load %arg7[%c0_13, %c0_14] : memref<8x6xf32, #tpu.memory_space<vmem>>, vector<8x6xf32>
    %cst_15 = arith.constant dense<0.000000e+00> : vector<8x6xf32>
    %16 = tpu.matmul %12, %15, %cst_15 {dimension_numbers = #tpu.dot_dimension_numbers<[1], [0], [0], [1], [0, 0, 1, 1], [], []>} : vector<8x8xf32>, vector<8x6xf32>, vector<8x6xf32> -> vector<8x6xf32>
    %17 = arith.addf %14, %16 : vector<8x6xf32>
    %c0_16 = arith.constant 0 : index
    %c0_17 = arith.constant 0 : index
    %18 = vector.load %arg8[%c0_16, %c0_17] : memref<1x6xf32, #tpu.memory_space<vmem>>, vector<1x6xf32>
    %19 = vector.broadcast %18 : vector<1x6xf32> to vector<8x6xf32>
    %20 = arith.addf %17, %19 : vector<8x6xf32>
    %cst_18 = arith.constant 0.000000e+00 : f32
    %21 = vector.broadcast %cst_18 : f32 to vector<8x6xf32>
    %22 = arith.maximumf %20, %21 : vector<8x6xf32>
    %c0_19 = arith.constant 0 : index
    %c0_20 = arith.constant 0 : index
    %23 = vector.load %arg11[%c0_19, %c0_20] : memref<8x6xf32, #tpu.memory_space<vmem>>, vector<8x6xf32>
    tpu.vector_store %arg11[%c0_19, %c0_20], %22 {strides = array<i32>} : memref<8x6xf32, #tpu.memory_space<vmem>>, vector<8x6xf32>,
    %c0_21 = arith.constant 0 : index
    %c0_22 = arith.constant 0 : index
    %24 = vector.load %arg9[%c0_21, %c0_22] : memref<64x40xf32, #tpu.memory_space<vmem>>, vector<64x40xf32>
    %cst_23 = arith.constant dense<0.000000e+00> : vector<8x40xf32>
    %25 = tpu.matmul %9, %24, %cst_23 {dimension_numbers = #tpu.dot_dimension_numbers<[1], [0], [0], [1], [0, 0, 1, 1], [], []>} : vector<8x64xf32>, vector<64x40xf32>, vector<8x40xf32> -> vector<8x40xf32>
    %c0_24 = arith.constant 0 : index
    %c0_25 = arith.constant 0 : index
    %26 = vector.load %arg10[%c0_24, %c0_25] : memref<1x40xf32, #tpu.memory_space<vmem>>, vector<1x40xf32>
    %27 = vector.broadcast %26 : vector<1x40xf32> to vector<8x40xf32>
    %28 = arith.addf %25, %27 : vector<8x40xf32>
    %c0_26 = arith.constant 0 : index
    %c0_27 = arith.constant 0 : index
    %29 = vector.load %arg12[%c0_26, %c0_27] : memref<8x40xf32, #tpu.memory_space<vmem>>, vector<8x40xf32>
    tpu.vector_store %arg12[%c0_26, %c0_27], %28 {strides = array<i32>} : memref<8x40xf32, #tpu.memory_space<vmem>>, vector<8x40xf32>,
    return
  }
  func.func @transform_0(%arg0: i32) -> (i32, i32) {
    %c0_i32 = arith.constant 0 : i32
    %c0_i32_0 = arith.constant 0 : i32
    return %arg0, %c0_i32 : i32, i32
  }
  func.func @transform_1(%arg0: i32) -> (i32, i32) {
    %c0_i32 = arith.constant 0 : i32
    %c0_i32_0 = arith.constant 0 : i32
    return %arg0, %c0_i32 : i32, i32
  }
  func.func @transform_2(%arg0: i32) -> (i32, i32) {
    %c0_i32 = arith.constant 0 : i32
    %c0_i32_0 = arith.constant 0 : i32
    %c0_i32_1 = arith.constant 0 : i32
    return %c0_i32, %c0_i32_0 : i32, i32
  }
  func.func @transform_3(%arg0: i32) -> (i32, i32) {
    %c0_i32 = arith.constant 0 : i32
    %c0_i32_0 = arith.constant 0 : i32
    %c0_i32_1 = arith.constant 0 : i32
    return %c0_i32, %c0_i32_0 : i32, i32
  }
  func.func @transform_4(%arg0: i32) -> (i32, i32) {
    %c0_i32 = arith.constant 0 : i32
    %c0_i32_0 = arith.constant 0 : i32
    %c0_i32_1 = arith.constant 0 : i32
    return %c0_i32, %c0_i32_0 : i32, i32
  }
  func.func @transform_5(%arg0: i32) -> (i32, i32) {
    %c0_i32 = arith.constant 0 : i32
    %c0_i32_0 = arith.constant 0 : i32
    %c0_i32_1 = arith.constant 0 : i32
    return %c0_i32, %c0_i32_0 : i32, i32
  }
  func.func @transform_6(%arg0: i32) -> (i32, i32) {
    %c0_i32 = arith.constant 0 : i32
    %c0_i32_0 = arith.constant 0 : i32
    %c0_i32_1 = arith.constant 0 : i32
    return %c0_i32, %c0_i32_0 : i32, i32
  }
  func.func @transform_7(%arg0: i32) -> (i32, i32) {
    %c0_i32 = arith.constant 0 : i32
    %c0_i32_0 = arith.constant 0 : i32
    %c0_i32_1 = arith.constant 0 : i32
    return %c0_i32, %c0_i32_0 : i32, i32
  }
  func.func @transform_8(%arg0: i32) -> (i32, i32) {
    %c0_i32 = arith.constant 0 : i32
    %c0_i32_0 = arith.constant 0 : i32
    %c0_i32_1 = arith.constant 0 : i32
    return %c0_i32, %c0_i32_0 : i32, i32
  }
  func.func @transform_9(%arg0: i32) -> (i32, i32) {
    %c0_i32 = arith.constant 0 : i32
    %c0_i32_0 = arith.constant 0 : i32
    %c0_i32_1 = arith.constant 0 : i32
    return %c0_i32, %c0_i32_0 : i32, i32
  }
  func.func @transform_10(%arg0: i32) -> (i32, i32) {
    %c0_i32 = arith.constant 0 : i32
    %c0_i32_0 = arith.constant 0 : i32
    return %arg0, %c0_i32 : i32, i32
  }
  func.func @transform_11(%arg0: i32) -> (i32, i32) {
    %c0_i32 = arith.constant 0 : i32
    %c0_i32_0 = arith.constant 0 : i32
    return %arg0, %c0_i32 : i32, i32
  }
}

</mosaic_0001>

<llo_original>
// kernel: cvp_linear_pallas.1
$region0: #{cvp_linear_pallas.1}
  #allocation0 [shape = 'u32[]', space=smem, size = 0x4, offset = 0x4, fixed_abs, tag = 'smem constant byte address 0x4 - core index']
  #allocation1 [shape = 'u32[72,128]{1,0:T(1,128)}', space=vmem, size = 0x9000, scoped, tag = 'internal scratch']
  %s0 = inlined_call_operand.vmem [shape: f32[16,4], index: 0, kind: input, shape index: {}]
  %s1 = inlined_call_operand.vmem [shape: f32[16,32], index: 1, kind: input, shape index: {}]
  %s2 = inlined_call_operand.vmem [shape: f32[32,192], index: 2, kind: input, shape index: {}]
  %s3 = inlined_call_operand.vmem [shape: f32[1,192], index: 3, kind: input, shape index: {}]
  %s4 = inlined_call_operand.vmem [shape: f32[64,8], index: 4, kind: input, shape index: {}]
  %s5 = inlined_call_operand.vmem [shape: f32[4,6], index: 5, kind: input, shape index: {}]
  %s6 = inlined_call_operand.vmem [shape: f32[8,6], index: 6, kind: input, shape index: {}]
  %s7 = inlined_call_operand.vmem [shape: f32[1,6], index: 7, kind: input, shape index: {}]
  %s8 = inlined_call_operand.vmem [shape: f32[64,40], index: 8, kind: input, shape index: {}]
  %s9 = inlined_call_operand.vmem [shape: f32[1,40], index: 9, kind: input, shape index: {}]
  %s10 = inlined_call_operand.vmem [shape: f32[16,6], index: 10, kind: output, shape index: {0}]
  %s11 = inlined_call_operand.vmem [shape: f32[16,40], index: 11, kind: output, shape index: {1}]
  %12 = xla_tuple %s10, %s11
  %s13 = sld [smem:[#allocation0]]
  $region81: #{cvp_linear_pallas.1} parent=0
    _
  %s15 = ssub.s32 1, %s13
  %s16 = scalar_select 0, %s15, %s13
  loop: start=0, step=1, limit=4
  $region2: #{cvp_linear_pallas.1} parent=0 // loop_pre_header
    _
  $region3: #{cvp_linear_pallas.1} parent=0 // loop_header
    %s18 = sphi 0, %s22
    %p19 = scmp.ge.s32.totalorder %s18, 4
    %s28 = sphi 0, %s30
    %s31 = sphi 0, %s28
    %s32 = sphi 0, %s31
    %s48 = sphi 0, %s32
    %s54 = sphi 0, %s56
    %s57 = sphi 0, %s54
    %s58 = sphi 0, %s57
    %s74 = sphi 0, %s58
    %s78 = sphi 0, %s78
    %s80 = sphi 0, %s78
    %s81 = sphi 0, %s80
    %s95 = sphi 0, %s81
    %s99 = sphi 0, %s99
    %s101 = sphi 0, %s99
    %s102 = sphi 0, %s101
    %s116 = sphi 0, %s102
    %s120 = sphi 0, %s120
    %s122 = sphi 0, %s120
    %s123 = sphi 0, %s122
    %s137 = sphi 0, %s123
    %s141 = sphi 0, %s141
    %s143 = sphi 0, %s141
    %s144 = sphi 0, %s143
    %s158 = sphi 0, %s144
    %s162 = sphi 0, %s162
    %s164 = sphi 0, %s162
    %s165 = sphi 0, %s164
    %s179 = sphi 0, %s165
    %s183 = sphi 0, %s183
    %s185 = sphi 0, %s183
    %s186 = sphi 0, %s185
    %s200 = sphi 0, %s186
    %s204 = sphi 0, %s204
    %s206 = sphi 0, %s204
    %s207 = sphi 0, %s206
    %s221 = sphi 0, %s207
    %s225 = sphi 0, %s225
    %s227 = sphi 0, %s225
    %s228 = sphi 0, %s227
    %s242 = sphi 0, %s228
    %s248 = sphi 0, %s250
    %s251 = sphi 0, %s248
    %s252 = sphi 0, %s251
    %s268 = sphi 0, %s252
    %s274 = sphi 0, %s276
    %s277 = sphi 0, %s274
    %s278 = sphi 0, %s277
    %s294 = sphi 0, %s278
  $region4: #{cvp_linear_pallas.1} parent=0 // loop_header_branch
    %21 = sbr.rel (%p19) target = $region8
  $region5: #{cvp_linear_pallas.1} parent=0 // loop_body
    %s23 = ssub.s32 %s18, 1
    %s24 = ssub.s32 %s18, 2
    %s25 = sadd.s32 %s18, 1
    %s26 = ssub.s32 %s18, %s25
    %p27 = scmp.eq.s32.totalorder %s26, 0
    %s29 = sadd.s32 %s28, 1
    %s30 = scalar_select %p27, %s28, %s29
    %p33 = pneg %p27
    %p34 = scmp.eq.s32.totalorder %s18, 1
    %p35 = por %p33, %p34
    %p36 = scmp.ne.s32.totalorder %s28, %s31
    %p37 = scmp.eq.s32.totalorder %s18, 0
    %p38 = por %p36, %p37
    %p39 = scmp.ne.s32.totalorder %s28, %s31
    %p40 = scmp.eq.s32.totalorder %s23, 1
    %p41 = por %p39, %p40
    %p42 = scmp.ne.s32.totalorder %s31, %s32
    %p43 = scmp.eq.s32.totalorder %s23, 0
    %p44 = por %p42, %p43
    %p45 = scmp.ne.s32.totalorder %s31, %s32
    %p46 = scmp.eq.s32.totalorder %s24, 1
    %p47 = por %p45, %p46
    %p49 = scmp.ne.s32.totalorder %s32, %s48
    %p50 = scmp.eq.s32.totalorder %s24, 0
    %p51 = por %p49, %p50
    %s52 = ssub.s32 %s18, %s25
    %p53 = scmp.eq.s32.totalorder %s52, 0
    %s55 = sadd.s32 %s54, 1
    %s56 = scalar_select %p53, %s54, %s55
    %p59 = pneg %p53
    %p60 = scmp.eq.s32.totalorder %s18, 1
    %p61 = por %p59, %p60
    %p62 = scmp.ne.s32.totalorder %s54, %s57
    %p63 = scmp.eq.s32.totalorder %s18, 0
    %p64 = por %p62, %p63
    %p65 = scmp.ne.s32.totalorder %s54, %s57
    %p66 = scmp.eq.s32.totalorder %s23, 1
    %p67 = por %p65, %p66
    %p68 = scmp.ne.s32.totalorder %s57, %s58
    %p69 = scmp.eq.s32.totalorder %s23, 0
    %p70 = por %p68, %p69
    %p71 = scmp.ne.s32.totalorder %s57, %s58
    %p72 = scmp.eq.s32.totalorder %s24, 1
    %p73 = por %p71, %p72
    %p75 = scmp.ne.s32.totalorder %s58, %s74
    %p76 = scmp.eq.s32.totalorder %s24, 0
    %p77 = por %p75, %p76
    %s79 = sadd.s32 %s78, 1
    %p82 = scmp.eq.s32.totalorder %s18, 1
    %p83 = scmp.ne.s32.totalorder %s78, %s80
    %p84 = scmp.eq.s32.totalorder %s18, 0
    %p85 = por %p83, %p84
    %p86 = scmp.ne.s32.totalorder %s78, %s80
    %p87 = scmp.eq.s32.totalorder %s23, 1
    %p88 = por %p86, %p87
    %p89 = scmp.ne.s32.totalorder %s80, %s81
    %p90 = scmp.eq.s32.totalorder %s23, 0
    %p91 = por %p89, %p90
    %p92 = scmp.ne.s32.totalorder %s80, %s81
    %p93 = scmp.eq.s32.totalorder %s24, 1
    %p94 = por %p92, %p93
    %p96 = scmp.ne.s32.totalorder %s81, %s95
    %p97 = scmp.eq.s32.totalorder %s24, 0
    %p98 = por %p96, %p97
    %s100 = sadd.s32 %s99, 1
    %p103 = scmp.eq.s32.totalorder %s18, 1
    %p104 = scmp.ne.s32.totalorder %s99, %s101
    %p105 = scmp.eq.s32.totalorder %s18, 0
    %p106 = por %p104, %p105
    %p107 = scmp.ne.s32.totalorder %s99, %s101
    %p108 = scmp.eq.s32.totalorder %s23, 1
    %p109 = por %p107, %p108
    %p110 = scmp.ne.s32.totalorder %s101, %s102
    %p111 = scmp.eq.s32.totalorder %s23, 0
    %p112 = por %p110, %p111
    %p113 = scmp.ne.s32.totalorder %s101, %s102
    %p114 = scmp.eq.s32.totalorder %s24, 1
    %p115 = por %p113, %p114
    %p117 = scmp.ne.s32.totalorder %s102, %s116
    %p118 = scmp.eq.s32.totalorder %s24, 0
    %p119 = por %p117, %p118
    %s121 = sadd.s32 %s120, 1
    %p124 = scmp.eq.s32.totalorder %s18, 1
    %p125 = scmp.ne.s32.totalorder %s120, %s122
    %p126 = scmp.eq.s32.totalorder %s18, 0
    %p127 = por %p125, %p126
    %p128 = scmp.ne.s32.totalorder %s120, %s122
    %p129 = scmp.eq.s32.totalorder %s23, 1
    %p130 = por %p128, %p129
    %p131 = scmp.ne.s32.totalorder %s122, %s123
    %p132 = scmp.eq.s32.totalorder %s23, 0
    %p133 = por %p131, %p132
    %p134 = scmp.ne.s32.totalorder %s122, %s123
    %p135 = scmp.eq.s32.totalorder %s24, 1
    %p136 = por %p134, %p135
    %p138 = scmp.ne.s32.totalorder %s123, %s137
    %p139 = scmp.eq.s32.totalorder %s24, 0
    %p140 = por %p138, %p139
    %s142 = sadd.s32 %s141, 1
    %p145 = scmp.eq.s32.totalorder %s18, 1
    %p146 = scmp.ne.s32.totalorder %s141, %s143
    %p147 = scmp.eq.s32.totalorder %s18, 0
    %p148 = por %p146, %p147
    %p149 = scmp.ne.s32.totalorder %s141, %s143
    %p150 = scmp.eq.s32.totalorder %s23, 1
    %p151 = por %p149, %p150
    %p152 = scmp.ne.s32.totalorder %s143, %s144
    %p153 = scmp.eq.s32.totalorder %s23, 0
    %p154 = por %p152, %p153
    %p155 = scmp.ne.s32.totalorder %s143, %s144
    %p156 = scmp.eq.s32.totalorder %s24, 1
    %p157 = por %p155, %p156
    %p159 = scmp.ne.s32.totalorder %s144, %s158
    %p160 = scmp.eq.s32.totalorder %s24, 0
    %p161 = por %p159, %p160
    %s163 = sadd.s32 %s162, 1
    %p166 = scmp.eq.s32.totalorder %s18, 1
    %p167 = scmp.ne.s32.totalorder %s162, %s164
    %p168 = scmp.eq.s32.totalorder %s18, 0
    %p169 = por %p167, %p168
    %p170 = scmp.ne.s32.totalorder %s162, %s164
    %p171 = scmp.eq.s32.totalorder %s23, 1
    %p172 = por %p170, %p171
    %p173 = scmp.ne.s32.totalorder %s164, %s165
    %p174 = scmp.eq.s32.totalorder %s23, 0
    %p175 = por %p173, %p174
    %p176 = scmp.ne.s32.totalorder %s164, %s165
    %p177 = scmp.eq.s32.totalorder %s24, 1
    %p178 = por %p176, %p177
    %p180 = scmp.ne.s32.totalorder %s165, %s179
    %p181 = scmp.eq.s32.totalorder %s24, 0
    %p182 = por %p180, %p181
    %s184 = sadd.s32 %s183, 1
    %p187 = scmp.eq.s32.totalorder %s18, 1
    %p188 = scmp.ne.s32.totalorder %s183, %s185
    %p189 = scmp.eq.s32.totalorder %s18, 0
    %p190 = por %p188, %p189
    %p191 = scmp.ne.s32.totalorder %s183, %s185
    %p192 = scmp.eq.s32.totalorder %s23, 1
    %p193 = por %p191, %p192
    %p194 = scmp.ne.s32.totalorder %s185, %s186
    %p195 = scmp.eq.s32.totalorder %s23, 0
    %p196 = por %p194, %p195
    %p197 = scmp.ne.s32.totalorder %s185, %s186
    %p198 = scmp.eq.s32.totalorder %s24, 1
    %p199 = por %p197, %p198
    %p201 = scmp.ne.s32.totalorder %s186, %s200
    %p202 = scmp.eq.s32.totalorder %s24, 0
    %p203 = por %p201, %p202
    %s205 = sadd.s32 %s204, 1
    %p208 = scmp.eq.s32.totalorder %s18, 1
    %p209 = scmp.ne.s32.totalorder %s204, %s206
    %p210 = scmp.eq.s32.totalorder %s18, 0
    %p211 = por %p209, %p210
    %p212 = scmp.ne.s32.totalorder %s204, %s206
    %p213 = scmp.eq.s32.totalorder %s23, 1
    %p214 = por %p212, %p213
    %p215 = scmp.ne.s32.totalorder %s206, %s207
    %p216 = scmp.eq.s32.totalorder %s23, 0
    %p217 = por %p215, %p216
    %p218 = scmp.ne.s32.totalorder %s206, %s207
    %p219 = scmp.eq.s32.totalorder %s24, 1
    %p220 = por %p218, %p219
    %p222 = scmp.ne.s32.totalorder %s207, %s221
    %p223 = scmp.eq.s32.totalorder %s24, 0
    %p224 = por %p222, %p223
    %s226 = sadd.s32 %s225, 1
    %p229 = scmp.eq.s32.totalorder %s18, 1
    %p230 = scmp.ne.s32.totalorder %s225, %s227
    %p231 = scmp.eq.s32.totalorder %s18, 0
    %p232 = por %p230, %p231
    %p233 = scmp.ne.s32.totalorder %s225, %s227
    %p234 = scmp.eq.s32.totalorder %s23, 1
    %p235 = por %p233, %p234
    %p236 = scmp.ne.s32.totalorder %s227, %s228
    %p237 = scmp.eq.s32.totalorder %s23, 0
    %p238 = por %p236, %p237
    %p239 = scmp.ne.s32.totalorder %s227, %s228
    %p240 = scmp.eq.s32.totalorder %s24, 1
    %p241 = por %p239, %p240
    %p243 = scmp.ne.s32.totalorder %s228, %s242
    %p244 = scmp.eq.s32.totalorder %s24, 0
    %p245 = por %p243, %p244
    %s246 = ssub.s32 %s18, %s25
    %p247 = scmp.eq.s32.totalorder %s246, 0
    %s249 = sadd.s32 %s248, 1
    %s250 = scalar_select %p247, %s248, %s249
    %p253 = pneg %p247
    %p254 = scmp.eq.s32.totalorder %s18, 1
    %p255 = por %p253, %p254
    %p256 = scmp.ne.s32.totalorder %s248, %s251
    %p257 = scmp.eq.s32.totalorder %s18, 0
    %p258 = por %p256, %p257
    %p259 = scmp.ne.s32.totalorder %s248, %s251
    %p260 = scmp.eq.s32.totalorder %s23, 1
    %p261 = por %p259, %p260
    %p262 = scmp.ne.s32.totalorder %s251, %s252
    %p263 = scmp.eq.s32.totalorder %s23, 0
    %p264 = por %p262, %p263
    %p265 = scmp.ne.s32.totalorder %s251, %s252
    %p266 = scmp.eq.s32.totalorder %s24, 1
    %p267 = por %p265, %p266
    %p269 = scmp.ne.s32.totalorder %s252, %s268
    %p270 = scmp.eq.s32.totalorder %s24, 0
    %p271 = por %p269, %p270
    %s272 = ssub.s32 %s18, %s25
    %p273 = scmp.eq.s32.totalorder %s272, 0
    %s275 = sadd.s32 %s274, 1
    %s276 = scalar_select %p273, %s274, %s275
    %p279 = pneg %p273
    %p280 = scmp.eq.s32.totalorder %s18, 1
    %p281 = por %p279, %p280
    %p282 = scmp.ne.s32.totalorder %s274, %s277
    %p283 = scmp.eq.s32.totalorder %s18, 0
    %p284 = por %p282, %p283
    %p285 = scmp.ne.s32.totalorder %s274, %s277
    %p286 = scmp.eq.s32.totalorder %s23, 1
    %p287 = por %p285, %p286
    %p288 = scmp.ne.s32.totalorder %s277, %s278
    %p289 = scmp.eq.s32.totalorder %s23, 0
    %p290 = por %p288, %p289
    %p291 = scmp.ne.s32.totalorder %s277, %s278
    %p292 = scmp.eq.s32.totalorder %s24, 1
    %p293 = por %p291, %p292
    %p295 = scmp.ne.s32.totalorder %s278, %s294
    %p296 = scmp.eq.s32.totalorder %s24, 0
    %p297 = por %p295, %p296
    %p298 = scmp.le.s32.totalorder 1, %s18
    %p299 = scmp.lt.s32.totalorder %s18, 3
    %p300 = pnand %p298, %p299
    %p301 = pneg %p300
    // Predicated region
    $region9: #{cvp_linear_pallas.1} parent=5 // pred_check
      _
    $region10: #{cvp_linear_pallas.1} parent=5 // pred_check_branch
      %303 = sbr.rel (%p300) target = $region12
    $region11: #{cvp_linear_pallas.1} parent=5 // pred_region
      %s304 = ssub.s32 %s18, 1
      // Predicated region
      $region13: #{cvp_linear_pallas.1} parent=11 // pred_check
        %p305 = pneg %p91
      $region14: #{cvp_linear_pallas.1} parent=11 // pred_check_branch
        %307 = sbr.rel (%p305) target = $region16
      $region15: #{cvp_linear_pallas.1} parent=11 // pred_region
        _
      $region16: #{cvp_linear_pallas.1} parent=11 // pred_fallthru
        _
      // Predicated region
      $region17: #{cvp_linear_pallas.1} parent=11 // pred_check
        %p308 = pneg %p112
      $region18: #{cvp_linear_pallas.1} parent=11 // pred_check_branch
        %310 = sbr.rel (%p308) target = $region20
      $region19: #{cvp_linear_pallas.1} parent=11 // pred_region
        _
      $region20: #{cvp_linear_pallas.1} parent=11 // pred_fallthru
        _
      // Predicated region
      $region21: #{cvp_linear_pallas.1} parent=11 // pred_check
        %p311 = pneg %p133
      $region22: #{cvp_linear_pallas.1} parent=11 // pred_check_branch
        %313 = sbr.rel (%p311) target = $region24
      $region23: #{cvp_linear_pallas.1} parent=11 // pred_region
        _
      $region24: #{cvp_linear_pallas.1} parent=11 // pred_fallthru
        _
      // Predicated region
      $region25: #{cvp_linear_pallas.1} parent=11 // pred_check
        %p314 = pneg %p154
      $region26: #{cvp_linear_pallas.1} parent=11 // pred_check_branch
        %316 = sbr.rel (%p314) target = $region28
      $region27: #{cvp_linear_pallas.1} parent=11 // pred_region
        _
      $region28: #{cvp_linear_pallas.1} parent=11 // pred_fallthru
        _
      // Predicated region
      $region29: #{cvp_linear_pallas.1} parent=11 // pred_check
        %p317 = pneg %p175
      $region30: #{cvp_linear_pallas.1} parent=11 // pred_check_branch
        %319 = sbr.rel (%p317) target = $region32
      $region31: #{cvp_linear_pallas.1} parent=11 // pred_region
        _
      $region32: #{cvp_linear_pallas.1} parent=11 // pred_fallthru
        _
      // Predicated region
      $region33: #{cvp_linear_pallas.1} parent=11 // pred_check
        %p320 = pneg %p196
      $region34: #{cvp_linear_pallas.1} parent=11 // pred_check_branch
        %322 = sbr.rel (%p320) target = $region36
      $region35: #{cvp_linear_pallas.1} parent=11 // pred_region
        _
      $region36: #{cvp_linear_pallas.1} parent=11 // pred_fallthru
        _
      // Predicated region
      $region37: #{cvp_linear_pallas.1} parent=11 // pred_check
        %p323 = pneg %p217
      $region38: #{cvp_linear_pallas.1} parent=11 // pred_check_branch
        %325 = sbr.rel (%p323) target = $region40
      $region39: #{cvp_linear_pallas.1} parent=11 // pred_region
        _
      $region40: #{cvp_linear_pallas.1} parent=11 // pred_fallthru
        _
      // Predicated region
      $region41: #{cvp_linear_pallas.1} parent=11 // pred_check
        %p326 = pneg %p238
      $region42: #{cvp_linear_pallas.1} parent=11 // pred_check_branch
        %328 = sbr.rel (%p326) target = $region44
      $region43: #{cvp_linear_pallas.1} parent=11 // pred_region
        _
      $region44: #{cvp_linear_pallas.1} parent=11 // pred_fallthru
        _
    $region12: #{cvp_linear_pallas.1} parent=5 // pred_fallthru
      _
    %p329 = scmp.lt.s32.totalorder %s18, 2
    // Predicated region
    $region45: #{cvp_linear_pallas.1} parent=5 // pred_check
      %p330 = pneg %p329
    $region46: #{cvp_linear_pallas.1} parent=5 // pred_check_branch
      %332 = sbr.rel (%p330) target = $region48
    $region47: #{cvp_linear_pallas.1} parent=5 // pred_region
      // Predicated region
      $region49: #{cvp_linear_pallas.1} parent=47 // pred_check
        %p333 = pneg %p38
      $region50: #{cvp_linear_pallas.1} parent=47 // pred_check_branch
        %335 = sbr.rel (%p333) target = $region52
      $region51: #{cvp_linear_pallas.1} parent=47 // pred_region
        %p336 = scmp.lt.s32.totalorder %s18, 1
        %s337 = scalar_select %p336, %s18, 1
        %s338 = smul.addr %s337, 8
        %s339 = scalar_lea.vmem %s0, %s338
      $region52: #{cvp_linear_pallas.1} parent=47 // pred_fallthru
        _
      // Predicated region
      $region53: #{cvp_linear_pallas.1} parent=47 // pred_check
        %p340 = pneg %p64
      $region54: #{cvp_linear_pallas.1} parent=47 // pred_check_branch
        %342 = sbr.rel (%p340) target = $region56
      $region55: #{cvp_linear_pallas.1} parent=47 // pred_region
        %p343 = scmp.lt.s32.totalorder %s18, 1
        %s344 = scalar_select %p343, %s18, 1
        %s345 = smul.addr %s344, 8
        %s346 = scalar_lea.vmem %s1, %s345
      $region56: #{cvp_linear_pallas.1} parent=47 // pred_fallthru
        _
    $region48: #{cvp_linear_pallas.1} parent=5 // pred_fallthru
      _
    %p347 = scmp.le.s32.totalorder 1, %s18
    %p348 = scmp.lt.s32.totalorder %s18, 3
    %p349 = pnand %p347, %p348
    %p350 = pneg %p349
    // Predicated region
    $region57: #{cvp_linear_pallas.1} parent=5 // pred_check
      _
    $region58: #{cvp_linear_pallas.1} parent=5 // pred_check_branch
      %352 = sbr.rel (%p349) target = $region60
    $region59: #{cvp_linear_pallas.1} parent=5 // pred_region
      %s353 = ssub.s32 %s18, 1
      %p354 = scmp.lt.s32.totalorder %s23, 1
      %s355 = scalar_select %p354, %s23, 1
      %s356 = smul.addr %s355, 8
      %s357 = scalar_lea.vmem %s0, %s356
      %p358 = pneg %p44
      %p359 = pneg %p41
      %p360 = scmp.lt.s32.totalorder %s23, 1
      %s361 = scalar_select %p360, %s23, 1
      %s362 = smul.addr %s361, 8
      %s363 = scalar_lea.vmem %s1, %s362
      %p364 = pneg %p70
      %p365 = pneg %p67
      %p366 = pneg %p91
      %p367 = pneg %p88
      %p368 = pneg %p112
      %p369 = pneg %p109
      %p370 = pneg %p133
      %p371 = pneg %p130
      %p372 = pneg %p154
      %p373 = pneg %p151
      %p374 = pneg %p175
      %p375 = pneg %p172
      %p376 = pneg %p196
      %p377 = pneg %p193
      %p378 = pneg %p217
      %p379 = pneg %p214
      %p380 = pneg %p238
      %p381 = pneg %p235
      %p382 = pneg %p264
      %p383 = pneg %p261
      %p384 = scmp.lt.s32.totalorder %s23, 1
      %s385 = scalar_select %p384, %s23, 1
      %s386 = smul.addr %s385, 8
      %s387 = scalar_lea.vmem %s10, %s386
      %p388 = pneg %p290
      %p389 = pneg %p287
      %p390 = scmp.lt.s32.totalorder %s23, 1
      %s391 = scalar_select %p390, %s23, 1
      %s392 = smul.addr %s391, 8
      %s393 = scalar_lea.vmem %s11, %s392
      %p394 = scmp.lt.s32.totalorder %s23, 1
      %s395 = scalar_select %p394, %s23, 1
      %s396 = smul.addr %s395, 8
      %s397 = scalar_lea.vmem %s0, %s396
      %p398 = scmp.lt.s32.totalorder %s23, 1
      %s399 = scalar_select %p398, %s23, 1
      %s400 = smul.addr %s399, 8
      %s401 = scalar_lea.vmem %s1, %s400
      %p402 = scmp.lt.s32.totalorder %s23, 1
      %s403 = scalar_select %p402, %s23, 1
      %s404 = smul.addr %s403, 8
      %s405 = scalar_lea.vmem %s10, %s404
      %p406 = scmp.lt.s32.totalorder %s23, 1
      %s407 = scalar_select %p406, %s23, 1
      %s408 = smul.addr %s407, 8
      %s409 = scalar_lea.vmem %s11, %s408
      %v410 = vld [vmem:[%s397] sm:$0xff]
      %v411 = vld [vmem:[%s401] sm:$0xff]
      %v412 = vld [vmem:[%s2] sm:$0xff]
      %v413 = vld [vmem:[%s2 + $0x8] sm:$0xff]
      %v414 = vld [vmem:[%s2 + $0x10] sm:$0xff]
      %v415 = vld [vmem:[%s2 + $0x18] sm:$0xff]
      %v416 = vld [vmem:[%s2 + $0x20] sm:$0xff]
      %v417 = vld [vmem:[%s2 + $0x28] sm:$0xff]
      %v418 = vld [vmem:[%s2 + $0x30] sm:$0xff]
      %v419 = vld [vmem:[%s2 + $0x38] sm:$0xff]
      %v420 = vld [vmem:[%s3] sm:$0x3]
      %v422 = vperm.slane %v420, 0
      %v423 = vperm.slane %v420, 1
      %vm426 = vcmask 261120
      %v428 = vsel %vm426, %v411, 0
      %430 = vmatpush.msra.mxu0 0.0
      %431 = vmatpush.msra.mxu0 0.0
      %432 = vmatpush.msra.mxu0 0.0
      %433 = vmatpush.msra.mxu0 0.0
      %434 = vmatpush.msra.mxu0 0.0
      %435 = vmatpush.msra.mxu0 0.0
      %436 = vmatpush.msra.mxu0 0.0
      %437 = vmatpush.msra.mxu0 0.0
      %438 = vmatpush.msra.mxu0 0.0
      %439 = vmatpush.msra.mxu0 0.0
      %440 = vmatpush.msra.mxu0 0.0
      %441 = vmatpush.msra.mxu0 0.0
      %442 = vmatpush.msra.mxu0 %v418
      %443 = vmatpush.msra.mxu0 %v416
      %444 = vmatpush.msra.mxu0 %v414
      %445 = vmatpush.msra.mxu0 %v412
      %446 = vmatmul.f32.gmra.mxu0 %v428
      %v447 = vpop.f32.mrf.mxu0
      %v448 = vadd.f32 %v422, %v447
      %449 = vdwg.mxu0
      %450 = vmatpush.msra.mxu0 0.0
      %451 = vmatpush.msra.mxu0 0.0
      %452 = vmatpush.msra.mxu0 0.0
      %453 = vmatpush.msra.mxu0 0.0
      %454 = vmatpush.msra.mxu0 0.0
      %455 = vmatpush.msra.mxu0 0.0
      %456 = vmatpush.msra.mxu0 0.0
      %457 = vmatpush.msra.mxu0 0.0
      %458 = vmatpush.msra.mxu0 0.0
      %459 = vmatpush.msra.mxu0 0.0
      %460 = vmatpush.msra.mxu0 0.0
      %461 = vmatpush.msra.mxu0 0.0
      %462 = vmatpush.msra.mxu0 %v419
      %463 = vmatpush.msra.mxu0 %v417
      %464 = vmatpush.msra.mxu0 %v415
      %465 = vmatpush.msra.mxu0 %v413
      %466 = vmatmul.f32.gmra.mxu0 %v428
      %v467 = vpop.f32.mrf.mxu0
      %v468 = vadd.f32 %v423, %v467
      %469 = vdwg.mxu0
      %471 = vrot.lane.b32.xlu0 %v448, 64
      %v472 = vpop.permute.xlu0 %471
      %v474 = vmul.f32 %v448, %v472
      %v475 = vld [vmem:[%s4] sm:$0xff]
      %v476 = vld [vmem:[%s4 + $0x8] sm:$0xff]
      %v477 = vld [vmem:[%s4 + $0x10] sm:$0xff]
      %v478 = vld [vmem:[%s4 + $0x18] sm:$0xff]
      %v479 = vld [vmem:[%s4 + $0x20] sm:$0xff]
      %v480 = vld [vmem:[%s4 + $0x28] sm:$0xff]
      %v481 = vld [vmem:[%s4 + $0x30] sm:$0xff]
      %v482 = vld [vmem:[%s4 + $0x38] sm:$0xff]
      %vm483 = vcmask 523264
      %v485 = vsel %vm483, %v474, 0
      %487 = vmatpush.msra.mxu0 0.0
      %488 = vmatpush.msra.mxu0 0.0
      %489 = vmatpush.msra.mxu0 0.0
      %490 = vmatpush.msra.mxu0 0.0
      %491 = vmatpush.msra.mxu0 0.0
      %492 = vmatpush.msra.mxu0 0.0
      %493 = vmatpush.msra.mxu0 0.0
      %494 = vmatpush.msra.mxu0 0.0
      %495 = vmatpush.msra.mxu0 %v482
      %496 = vmatpush.msra.mxu0 %v481
      %497 = vmatpush.msra.mxu0 %v480
      %498 = vmatpush.msra.mxu0 %v479
      %499 = vmatpush.msra.mxu0 %v478
      %500 = vmatpush.msra.mxu0 %v477
      %501 = vmatpush.msra.mxu0 %v476
      %502 = vmatpush.msra.mxu0 %v475
      %503 = vmatmul.f32.gmra.mxu0 %v485
      %v504 = vpop.f32.mrf.mxu0
      %v505 = vadd.f32 0.0, %v504
      %506 = vdwg.mxu0
      %v507 = vld [vmem:[%s5] sm:$0xf]
      %v508 = vld [vmem:[%s6] sm:$0xff]
      %vm509 = vcmask 64512
      %v511 = vsel %vm509, %v505, 0
      %513 = vmatpush.msra.mxu0 0.0
      %514 = vmatpush.msra.mxu0 0.0
      %515 = vmatpush.msra.mxu0 0.0
      %516 = vmatpush.msra.mxu0 0.0
      %517 = vmatpush.msra.mxu0 0.0
      %518 = vmatpush.msra.mxu0 0.0
      %519 = vmatpush.msra.mxu0 0.0
      %520 = vmatpush.msra.mxu0 0.0
      %521 = vmatpush.msra.mxu0 0.0
      %522 = vmatpush.msra.mxu0 0.0
      %523 = vmatpush.msra.mxu0 0.0
      %524 = vmatpush.msra.mxu0 0.0
      %525 = vmatpush.msra.mxu0 0.0
      %526 = vmatpush.msra.mxu0 0.0
      %527 = vmatpush.msra.mxu0 0.0
      %528 = vmatpush.msra.mxu0 %v508
      %529 = vmatmul.f32.gmra.mxu0 %v511
      %v530 = vpop.f32.mrf.mxu0
      %v531 = vadd.f32 0.0, %v530
      %532 = vdwg.mxu0
      %vm533 = vcmask 31744
      %v535 = vsel %vm533, %v410, 0
      %vm537 = vcmask 1043456
      %v539 = vsel %vm537, %v507, 0
      %541 = vmatpush.msra.mxu0 0.0
      %542 = vmatpush.msra.mxu0 0.0
      %543 = vmatpush.msra.mxu0 0.0
      %544 = vmatpush.msra.mxu0 0.0
      %545 = vmatpush.msra.mxu0 0.0
      %546 = vmatpush.msra.mxu0 0.0
      %547 = vmatpush.msra.mxu0 0.0
      %548 = vmatpush.msra.mxu0 0.0
      %549 = vmatpush.msra.mxu0 0.0
      %550 = vmatpush.msra.mxu0 0.0
      %551 = vmatpush.msra.mxu0 0.0
      %552 = vmatpush.msra.mxu0 0.0
      %553 = vmatpush.msra.mxu0 0.0
      %554 = vmatpush.msra.mxu0 0.0
      %555 = vmatpush.msra.mxu0 0.0
      %556 = vmatpush.msra.mxu0 %v539
      %557 = vmatmul.f32.gmra.mxu0 %v535
      %v558 = vpop.f32.mrf.mxu0
      %v559 = vadd.f32 %v531, %v558
      %560 = vdwg.mxu0
      %v561 = vld [vmem:[%s7] sm:$0x1]
      %v563 = vperm.slane %v561, 0
      %v565 = vadd.f32 %v559, %v563
      %v566 = vmax.f32 %v565, 0.0
      %vm567 = vcmask 48128
      %568 = vst.msk [vmem:[%s405] sm:$0xff] %vm567, %v566
      %v569 = vld [vmem:[%s8] sm:$0xff]
      %v570 = vld [vmem:[%s8 + $0x8] sm:$0xff]
      %v571 = vld [vmem:[%s8 + $0x10] sm:$0xff]
      %v572 = vld [vmem:[%s8 + $0x18] sm:$0xff]
      %v573 = vld [vmem:[%s8 + $0x20] sm:$0xff]
      %v574 = vld [vmem:[%s8 + $0x28] sm:$0xff]
      %v575 = vld [vmem:[%s8 + $0x30] sm:$0xff]
      %v576 = vld [vmem:[%s8 + $0x38] sm:$0xff]
      %v577 = vld [vmem:[%s9] sm:$0x1]
      %v579 = vperm.slane %v577, 0
      %v582 = vsel %vm483, %v468, 0
      %584 = vmatpush.msra.mxu0 0.0
      %585 = vmatpush.msra.mxu0 0.0
      %586 = vmatpush.msra.mxu0 0.0
      %587 = vmatpush.msra.mxu0 0.0
      %588 = vmatpush.msra.mxu0 0.0
      %589 = vmatpush.msra.mxu0 0.0
      %590 = vmatpush.msra.mxu0 0.0
      %591 = vmatpush.msra.mxu0 0.0
      %592 = vmatpush.msra.mxu0 %v576
      %593 = vmatpush.msra.mxu0 %v575
      %594 = vmatpush.msra.mxu0 %v574
      %595 = vmatpush.msra.mxu0 %v573
      %596 = vmatpush.msra.mxu0 %v572
      %597 = vmatpush.msra.mxu0 %v571
      %598 = vmatpush.msra.mxu0 %v570
      %599 = vmatpush.msra.mxu0 %v569
      %600 = vmatmul.f32.gmra.mxu0 %v582
      %v601 = vpop.f32.mrf.mxu0
      %v602 = vadd.f32 %v579, %v601
      %603 = vdwg.mxu0
      %vm604 = vcmask 326656
      %605 = vst.msk [vmem:[%s409] sm:$0xff] %vm604, %v602
      %p606 = scmp.lt.s32.totalorder %s23, 1
      %s607 = scalar_select %p606, %s23, 1
      %s608 = smul.addr %s607, 8
      %s609 = scalar_lea.vmem %s10, %s608
      %p610 = scmp.lt.s32.totalorder %s23, 1
      %s611 = scalar_select %p610, %s23, 1
      %s612 = smul.addr %s611, 8
      %s613 = scalar_lea.vmem %s11, %s612
      // Predicated region
      $region61: #{cvp_linear_pallas.1} parent=59 // pred_check
        %p614 = pneg %p261
      $region62: #{cvp_linear_pallas.1} parent=59 // pred_check_branch
        %616 = sbr.rel (%p614) target = $region64
      $region63: #{cvp_linear_pallas.1} parent=59 // pred_region
        _
      $region64: #{cvp_linear_pallas.1} parent=59 // pred_fallthru
        _
      // Predicated region
      $region65: #{cvp_linear_pallas.1} parent=59 // pred_check
        %p617 = pneg %p287
      $region66: #{cvp_linear_pallas.1} parent=59 // pred_check_branch
        %619 = sbr.rel (%p617) target = $region68
      $region67: #{cvp_linear_pallas.1} parent=59 // pred_region
        _
      $region68: #{cvp_linear_pallas.1} parent=59 // pred_fallthru
        _
    $region60: #{cvp_linear_pallas.1} parent=5 // pred_fallthru
      _
    %p620 = scmp.le.s32.totalorder 2, %s18
    // Predicated region
    $region69: #{cvp_linear_pallas.1} parent=5 // pred_check
      %p621 = pneg %p620
    $region70: #{cvp_linear_pallas.1} parent=5 // pred_check_branch
      %623 = sbr.rel (%p621) target = $region72
    $region71: #{cvp_linear_pallas.1} parent=5 // pred_region
      %s624 = ssub.s32 %s18, 2
      // Predicated region
      $region73: #{cvp_linear_pallas.1} parent=71 // pred_check
        %p625 = pneg %p267
      $region74: #{cvp_linear_pallas.1} parent=71 // pred_check_branch
        %627 = sbr.rel (%p625) target = $region76
      $region75: #{cvp_linear_pallas.1} parent=71 // pred_region
        %p628 = scmp.lt.s32.totalorder %s24, 1
        %s629 = scalar_select %p628, %s24, 1
        %s630 = smul.addr %s629, 8
        %s631 = scalar_lea.vmem %s10, %s630
      $region76: #{cvp_linear_pallas.1} parent=71 // pred_fallthru
        _
      // Predicated region
      $region77: #{cvp_linear_pallas.1} parent=71 // pred_check
        %p632 = pneg %p293
      $region78: #{cvp_linear_pallas.1} parent=71 // pred_check_branch
        %634 = sbr.rel (%p632) target = $region80
      $region79: #{cvp_linear_pallas.1} parent=71 // pred_region
        %p635 = scmp.lt.s32.totalorder %s24, 1
        %s636 = scalar_select %p635, %s24, 1
        %s637 = smul.addr %s636, 8
        %s638 = scalar_lea.vmem %s11, %s637
      $region80: #{cvp_linear_pallas.1} parent=71 // pred_fallthru
        _
    $region72: #{cvp_linear_pallas.1} parent=5 // pred_fallthru
      _
  $region6: #{cvp_linear_pallas.1} parent=0 // loop_footer
    %s22 = sadd.s32 1, %s18
  $region7: #{cvp_linear_pallas.1} parent=0 // loop_footer_branch
    %17 = sbr.rel target = $region3
  $region8: #{cvp_linear_pallas.1} parent=0 // loop_exit
    _

</llo_original>
